<compile_context>
chip_gen: v7x
topology: tpu7x:2x2x1
jax: 0.10.0
libtpu: 0.0.40
codegen_flags: <defaults>
</compile_context>

<pallas_src>
import functools

import jax
import jax.numpy as jnp
from jax.experimental import pallas as pl
from jax.experimental.pallas import tpu as pltpu


def _spatial_tile(hw, rows, elt_bytes, target_bytes=4 << 20):
    """Pick a spatial tile: multiple of 128 that divides hw and keeps the
    block around `target_bytes`; fall back to the full extent otherwise."""
    if hw <= 128 or hw % 128 != 0:
        return hw
    max_t = max(128, (target_bytes // max(1, rows * elt_bytes)) // 128 * 128)
    t = min(hw, max_t)
    while hw % t != 0:
        t -= 128
    return max(t, 128)


def _pool_conv_kernel(x_ref, w_ref, b_ref, o_ref, acc_ref, *, inv_hw):
    # x_ref: (B, Cin, T_hw)  flattened-spatial tile of the input
    # w_ref: (Cin, Cout)     1x1 conv weight (pre-transposed in the wrapper)
    # b_ref: (1, Cout)       conv bias
    # o_ref: (B, Cout)       pooled + conv result (f32), resident accumulator out
    # acc_ref: (B, Cin) f32  running spatial sum
    s = pl.program_id(0)

    @pl.when(s == 0)
    def _():
        acc_ref[...] = jnp.zeros_like(acc_ref)

    acc_ref[...] += jnp.sum(x_ref[...].astype(jnp.float32), axis=-1)

    @pl.when(s == pl.num_programs(0) - 1)
    def _():
        pooled = acc_ref[...] * inv_hw                       # (B, Cin)
        # Tiny 1x1 conv: elementwise multiply + sublane reduce (robust lowering;
        # for large Cin/Cout this would become a jnp.dot on the MXU).
        y = jnp.sum(pooled[:, :, None] * w_ref[...][None, :, :], axis=1)
        o_ref[...] = y + b_ref[...]                          # (B, Cout)


def _broadcast_kernel(y_ref, o_ref):
    # y_ref: (B, Cout)        pooled+conv result
    # o_ref: (B, Cout, T_hw)  lane-dense output slab
    o_ref[...] = jnp.broadcast_to(
        y_ref[...][:, :, None], o_ref.shape).astype(o_ref.dtype)


def pool_forward(x, weight, bias):
    """x: (B, Cin, H, W); weight: (Cout, Cin) (1x1 conv); bias: (Cout,).

    Returns (B, Cout, H, W) == Pool(in_channels=Cin, out_channels=Cout)(x).
    """
    B, Cin, H, W = x.shape
    Cout = weight.shape[0]
    HW = H * W

    # Layout-only glue: flatten spatial dims so blocks are lane-dense.
    x3 = x.reshape(B, Cin, HW)
    wt = weight.astype(jnp.float32).T            # (Cin, Cout)
    b2 = bias.astype(jnp.float32).reshape(1, Cout)

    elt = jnp.dtype(x.dtype).itemsize
    t_in = _spatial_tile(HW, B * Cin, elt)

    # Kernel 1: global average pool (streamed over spatial tiles) + 1x1 conv.
    pooled_conv = pl.pallas_call(
        functools.partial(_pool_conv_kernel, inv_hw=1.0 / HW),
        out_shape=jax.ShapeDtypeStruct((B, Cout), jnp.float32),
        grid_spec=pltpu.PrefetchScalarGridSpec(
            num_scalar_prefetch=0,
            grid=(HW // t_in,),
            in_specs=[
                pl.BlockSpec((B, Cin, t_in), lambda s: (0, 0, s)),
                pl.BlockSpec((Cin, Cout), lambda s: (0, 0)),
                pl.BlockSpec((1, Cout), lambda s: (0, 0)),
            ],
            out_specs=pl.BlockSpec((B, Cout), lambda s: (0, 0)),
            scratch_shapes=[pltpu.VMEM((B, Cin), jnp.float32)],
        ),
        compiler_params=pltpu.CompilerParams(
            dimension_semantics=("arbitrary",)),
    )(x3, wt, b2)

    # Kernel 2: broadcast (== bilinear upsample of a 1x1 map) to (B, Cout, HW).
    t_out = _spatial_tile(HW, B * Cout, elt)
    out3 = pl.pallas_call(
        _broadcast_kernel,
        out_shape=jax.ShapeDtypeStruct((B, Cout, HW), x.dtype),
        grid_spec=pltpu.PrefetchScalarGridSpec(
            num_scalar_prefetch=0,
            grid=(HW // t_out,),
            in_specs=[pl.BlockSpec((B, Cout), lambda s: (0, 0))],
            out_specs=pl.BlockSpec((B, Cout, t_out), lambda s: (0, 0, s)),
        ),
        compiler_params=pltpu.CompilerParams(
            dimension_semantics=("parallel",)),
    )(pooled_conv)

    return out3.reshape(B, Cout, H, W)


if __name__ == "__main__":
    key = jax.random.PRNGKey(0)
    k1, k2, k3 = jax.random.split(key, 3)

    B, Cin, Cout, H, W = 2, 4, 8, 16, 16
    x = jax.random.normal(k1, (B, Cin, H, W), dtype=jnp.float32)
    weight = jax.random.normal(k2, (Cout, Cin), dtype=jnp.float32) * 0.1
    bias = jax.random.normal(k3, (Cout,), dtype=jnp.float32) * 0.1

    out = jax.block_until_ready(pool_forward(x, weight, bias))

    # Pure-JAX reference: AdaptiveAvgPool2d(1) -> 1x1 conv (+bias) ->
    # bilinear upsample of a 1x1 map == spatial broadcast.
    pooled = x.mean(axis=(2, 3))                       # (B, Cin)
    y = pooled @ weight.T + bias                       # (B, Cout)
    ref = jnp.broadcast_to(y[:, :, None, None], (B, Cout, H, W))

    assert out.shape == ref.shape == (B, Cout, H, W), out.shape
    assert jnp.allclose(out, ref, atol=1e-5, rtol=1e-5), float(
        jnp.max(jnp.abs(out - ref)))
    print("KERNEL_OK")
</pallas_src>

<mosaic_0001>
module attributes {stable_mosaic.version = 11 : i64} {
  func.func @_pool_conv_kernel(%arg0: i32, %arg1: memref<2x4x256xf32, #tpu.memory_space<vmem>>, %arg2: memref<4x8xf32, #tpu.memory_space<vmem>>, %arg3: memref<1x8xf32, #tpu.memory_space<vmem>>, %arg4: memref<2x8xf32, #tpu.memory_space<vmem>>, %arg5: memref<2x4xf32, #tpu.memory_space<vmem>>) attributes {dimension_semantics = [#tpu.dimension_semantics<arbitrary>], iteration_bounds = array<i64: 1>, scalar_prefetch = 0 : i64, scratch_operands = 1 : i64, tpu.core_type = #tpu.core_type<tc>, window_params = [{transform_indices = @transform_0, window_bounds = array<i64: 2, 4, 256>}, {pipeline_mode = #tpu.pipeline_mode<synchronous>, transform_indices = @transform_1, window_bounds = array<i64: 4, 8>}, {pipeline_mode = #tpu.pipeline_mode<synchronous>, transform_indices = @transform_2, window_bounds = array<i64: 1, 8>}, {pipeline_mode = #tpu.pipeline_mode<synchronous>, transform_indices = @transform_3, window_bounds = array<i64: 2, 8>}]} {
    %c0_i32 = arith.constant 0 : i32
    %0 = arith.cmpi eq, %arg0, %c0_i32 : i32
    %1 = arith.extui %0 : i1 to i32
    %c0_i32_0 = arith.constant 0 : i32
    %2 = arith.cmpi ne, %1, %c0_i32_0 : i32
    scf.if %2 {
      %cst_9 = arith.constant 0.000000e+00 : f32
      %11 = vector.broadcast %cst_9 : f32 to vector<2x4xf32>
      %c0_10 = arith.constant 0 : index
      %c0_11 = arith.constant 0 : index
      %12 = vector.load %arg5[%c0_10, %c0_11] : memref<2x4xf32, #tpu.memory_space<vmem>>, vector<2x4xf32>
      tpu.vector_store %arg5[%c0_10, %c0_11], %11 {strides = array<i32>} : memref<2x4xf32, #tpu.memory_space<vmem>>, vector<2x4xf32>,
    } else {
    }
    %c0 = arith.constant 0 : index
    %c0_1 = arith.constant 0 : index
    %3 = vector.load %arg5[%c0, %c0_1] : memref<2x4xf32, #tpu.memory_space<vmem>>, vector<2x4xf32>
    %c0_2 = arith.constant 0 : index
    %c0_3 = arith.constant 0 : index
    %c0_4 = arith.constant 0 : index
    %4 = vector.load %arg1[%c0_2, %c0_3, %c0_4] : memref<2x4x256xf32, #tpu.memory_space<vmem>>, vector<2x4x256xf32>
    %cst = arith.constant dense<0.000000e+00> : vector<2x4xf32>
    %5 = vector.multi_reduction <add>, %4, %cst [2] : vector<2x4x256xf32> to vector<2x4xf32>
    %6 = arith.addf %3, %5 : vector<2x4xf32>
    %c0_5 = arith.constant 0 : index
    %c0_6 = arith.constant 0 : index
    %7 = vector.load %arg5[%c0_5, %c0_6] : memref<2x4xf32, #tpu.memory_space<vmem>>, vector<2x4xf32>
    tpu.vector_store %arg5[%c0_5, %c0_6], %6 {strides = array<i32>} : memref<2x4xf32, #tpu.memory_space<vmem>>, vector<2x4xf32>,
    %c0_i32_7 = arith.constant 0 : i32
    %8 = arith.cmpi eq, %arg0, %c0_i32_7 : i32
    %9 = arith.extui %8 : i1 to i32
    %c0_i32_8 = arith.constant 0 : i32
    %10 = arith.cmpi ne, %9, %c0_i32_8 : i32
    scf.if %10 {
      %c0_9 = arith.constant 0 : index
      %c0_10 = arith.constant 0 : index
      %11 = vector.load %arg5[%c0_9, %c0_10] : memref<2x4xf32, #tpu.memory_space<vmem>>, vector<2x4xf32>
      %cst_11 = arith.constant 3.906250e-03 : f32
      %12 = vector.broadcast %cst_11 : f32 to vector<2x4xf32>
      %13 = arith.mulf %11, %12 : vector<2x4xf32>
      %14 = vector.shape_cast %13 : vector<2x4xf32> to vector<2x4x1xf32>
      %c0_12 = arith.constant 0 : index
      %c0_13 = arith.constant 0 : index
      %15 = vector.load %arg2[%c0_12, %c0_13] : memref<4x8xf32, #tpu.memory_space<vmem>>, vector<4x8xf32>
      %16 = vector.shape_cast %15 : vector<4x8xf32> to vector<1x4x8xf32>
      %17 = vector.broadcast %14 : vector<2x4x1xf32> to vector<2x4x8xf32>
      %18 = vector.broadcast %16 : vector<1x4x8xf32> to vector<2x4x8xf32>
      %19 = arith.mulf %17, %18 : vector<2x4x8xf32>
      %cst_14 = arith.constant dense<0.000000e+00> : vector<2x8xf32>
      %20 = vector.multi_reduction <add>, %19, %cst_14 [1] : vector<2x4x8xf32> to vector<2x8xf32>
      %c0_15 = arith.constant 0 : index
      %c0_16 = arith.constant 0 : index
      %21 = vector.load %arg3[%c0_15, %c0_16] : memref<1x8xf32, #tpu.memory_space<vmem>>, vector<1x8xf32>
      %22 = vector.broadcast %21 : vector<1x8xf32> to vector<2x8xf32>
      %23 = arith.addf %20, %22 : vector<2x8xf32>
      %c0_17 = arith.constant 0 : index
      %c0_18 = arith.constant 0 : index
      %24 = vector.load %arg4[%c0_17, %c0_18] : memref<2x8xf32, #tpu.memory_space<vmem>>, vector<2x8xf32>
      tpu.vector_store %arg4[%c0_17, %c0_18], %23 {strides = array<i32>} : memref<2x8xf32, #tpu.memory_space<vmem>>, vector<2x8xf32>,
    } else {
    }
    return
  }
  func.func @transform_0(%arg0: i32) -> (i32, i32, i32) {
    %c0_i32 = arith.constant 0 : i32
    %c0_i32_0 = arith.constant 0 : i32
    %c0_i32_1 = arith.constant 0 : i32
    return %c0_i32, %c0_i32_0, %arg0 : i32, i32, i32
  }
  func.func @transform_1(%arg0: i32) -> (i32, i32) {
    %c0_i32 = arith.constant 0 : i32
    %c0_i32_0 = arith.constant 0 : i32
    %c0_i32_1 = arith.constant 0 : i32
    return %c0_i32, %c0_i32_0 : i32, i32
  }
  func.func @transform_2(%arg0: i32) -> (i32, i32) {
    %c0_i32 = arith.constant 0 : i32
    %c0_i32_0 = arith.constant 0 : i32
    %c0_i32_1 = arith.constant 0 : i32
    return %c0_i32, %c0_i32_0 : i32, i32
  }
  func.func @transform_3(%arg0: i32) -> (i32, i32) {
    %c0_i32 = arith.constant 0 : i32
    %c0_i32_0 = arith.constant 0 : i32
    %c0_i32_1 = arith.constant 0 : i32
    return %c0_i32, %c0_i32_0 : i32, i32
  }
}

</mosaic_0001>

<llo_original>
// kernel: tpu_custom_call.1
$region0: #{tpu_custom_call.1}
  #allocation0 [shape = 'u32[]', space=smem, size = 0x4, offset = 0x4, fixed_abs, tag = 'smem constant byte address 0x4 - core index']
  #allocation1 [shape = 'u32[144,128]{1,0:T(1,128)}', space=vmem, size = 0x12000, scoped, tag = 'internal scratch']
  #allocation2 [shape = 'f32[2,4]{1,0:T(2,128)}', space=vmem, size = 0x400, scoped, tag = 'scratch operand']
  %s0 = inlined_call_operand.hbm [shape: f32[2,4,256], index: 0, kind: input, shape index: {}]
  %s1 = inlined_call_operand.hbm [shape: f32[4,8], index: 1, kind: input, shape index: {}]
  %s2 = inlined_call_operand.vmem [shape: f32[1,8], index: 2, kind: input, shape index: {}]
  %s3 = inlined_call_operand.hbm [shape: f32[2,8], index: 3, kind: output, shape index: {}]
  %s4 = sld [smem:[#allocation0]]
  $region38: #{tpu_custom_call.1} parent=0
    _
  %s6 = ssub.s32 1, %s4
  %s7 = scalar_select 0, %s6, %s4
  $region1: #{tpu_custom_call.1} parent=0
    #allocation3 [shape = 'u8[8192]{0}', space=vmem, size = 0x2000, scoped, tag = 'input window, operand 0, single buffered']
    #allocation4 [shape = 's32[1]{0}', space=sflag, size = 0x4, scoped, tag = 'scoped memory for tpu_custom_call.1']
    #allocation5 [shape = 's32[1]{0}', space=sflag, size = 0x4, scoped, tag = 'scoped memory for tpu_custom_call.1']
    #allocation6 [shape = 'u8[2048]{0}', space=vmem, size = 0x800, scoped, tag = 'input window, operand 1, single buffered']
    #allocation7 [shape = 's32[1]{0}', space=sflag, size = 0x4, scoped, tag = 'scoped memory for tpu_custom_call.1']
    #allocation8 [shape = 'u8[1024]{0}', space=vmem, size = 0x400, scoped, tag = 'output window, operand 0, single buffered']
    %8 = vsyncpa [#allocation4], 0
    %9 = vsyncpa [#allocation7], 0
    %10 = vsyncpa [#allocation5], 0
    // Predicated region
    $region2: #{tpu_custom_call.1} parent=1 // pred_check
      _
    $region3: #{tpu_custom_call.1} parent=1 // pred_check_branch
      %12 = sbr.rel (0) target = $region5
    $region4: #{tpu_custom_call.1} parent=1 // pred_region
      %s14 = ssub.s32 256, 256
      %15 = vsyncadd [#allocation4], %s14
      %s16 = sshll.u32 [#allocation3], 4
      %s17 = int_to_ptr.vmem [resolvable:$true] %s16
      %22 = dma.hbm_to_vmem [thread:$0]  %s0, 256, %s17, [#allocation4], 128, 128, 8
    $region5: #{tpu_custom_call.1} parent=1 // pred_fallthru
      _
    // Predicated region
    $region6: #{tpu_custom_call.1} parent=1 // pred_check
      _
    $region7: #{tpu_custom_call.1} parent=1 // pred_check_branch
      %24 = sbr.rel (0) target = $region9
    $region8: #{tpu_custom_call.1} parent=1 // pred_region
      %s26 = ssub.s32 64, 64
      %27 = vsyncadd [#allocation7], %s26
      %s29 = sshll.u32 [#allocation6], 4
      %s30 = int_to_ptr.vmem [resolvable:$true] %s29
      %32 = dma.hbm_to_vmem [thread:$0]  %s1, 64, %s30, [#allocation7]
    $region9: #{tpu_custom_call.1} parent=1 // pred_fallthru
      _
    // Predicated region
    $region10: #{tpu_custom_call.1} parent=1 // pred_check
      _
    $region11: #{tpu_custom_call.1} parent=1 // pred_check_branch
      %34 = sbr.rel (0) target = $region13
    $region12: #{tpu_custom_call.1} parent=1 // pred_region
      _
    $region13: #{tpu_custom_call.1} parent=1 // pred_fallthru
      _
    // Predicated region
    $region14: #{tpu_custom_call.1} parent=1 // pred_check
      _
    $region15: #{tpu_custom_call.1} parent=1 // pred_check_branch
      %36 = sbr.rel (0) target = $region17
    $region16: #{tpu_custom_call.1} parent=1 // pred_region
      %37 = dma.done [#allocation4], 256
    $region17: #{tpu_custom_call.1} parent=1 // pred_fallthru
      _
    // Predicated region
    $region18: #{tpu_custom_call.1} parent=1 // pred_check
      _
    $region19: #{tpu_custom_call.1} parent=1 // pred_check_branch
      %39 = sbr.rel (0) target = $region21
    $region20: #{tpu_custom_call.1} parent=1 // pred_region
      %40 = dma.done [#allocation7], 64
    $region21: #{tpu_custom_call.1} parent=1 // pred_fallthru
      _
    %p41 = scmp.eq.s32.totalorder 0, 0
    // Predicated region
    $region22: #{tpu_custom_call.1} parent=1 // pred_check
      %p42 = pneg %p41
    $region23: #{tpu_custom_call.1} parent=1 // pred_check_branch
      %44 = sbr.rel (%p42) target = $region25
    $region24: #{tpu_custom_call.1} parent=1 // pred_region
      %vm45 = vcmask 25600
      %46 = vst.msk [vmem:[#allocation2] sm:$0x3] %vm45, 0.0
    $region25: #{tpu_custom_call.1} parent=1 // pred_fallthru
      _
    %v47 = vld [vmem:[#allocation2] sm:$0x3]
    %v48 = vld [vmem:[#allocation3] sm:$0xff]
    %v49 = vld [vmem:[#allocation3 + $0x8] sm:$0xff]
    %v52 = vcombine.high %v48, %v48
    %v53 = vcombine.high %v49, %v49
    %vm56 = vcmask 1043456
    %v57 = vsel %vm56, %v48, 0.0
    %v58 = vsel %vm56, %v52, 0.0
    %v59 = vadd.f32 %v57, %v58
    %60 = vadd.xlane.f32.xlu0 %v59
    %v61 = vpop.xlane.xlu0 %60
    %v62 = vsel %vm56, %v49, 0.0
    %v63 = vsel %vm56, %v53, 0.0
    %v64 = vadd.f32 %v62, %v63
    %65 = vadd.xlane.f32.xlu0 %v64
    %v66 = vpop.xlane.xlu0 %65
    %v69 = vlaneseq
    %v70 = vand.u32 %v69, 127
    %v71 = vlaneseq
    %v72 = vshrl.u32 %v71, 7
    %v73 = vsub.s32 %v70, %v72
    %v74 = vrot.slane %v61, %v73
    %v75 = vlaneseq
    %v76 = vshrl.u32 %v75, 7
    %v77 = vsub.s32 %v70, %v76
    %v78 = vrot.slane %v66, %v77
    %vm79 = vcmask 1041409
    %v80 = vsel %vm79, %v78, %v74
    %v82 = vadd.f32 %v47, %v80
    %vm83 = vcmask 25600
    %84 = vst.msk [vmem:[#allocation2] sm:$0x3] %vm83, %v82
    // Predicated region
    $region26: #{tpu_custom_call.1} parent=1 // pred_check
      %p85 = pneg %p41
    $region27: #{tpu_custom_call.1} parent=1 // pred_check_branch
      %87 = sbr.rel (%p85) target = $region29
    $region28: #{tpu_custom_call.1} parent=1 // pred_region
      %v88 = vld [vmem:[#allocation2] sm:$0x3]
      %v89 = vmul.f32 %v88, 0.00390625
      %v90 = vlaneseq
      %v91 = vshrl.u32 %v90, 7
      %v92 = vsub.s32 0, %v91
      %v93 = vrot.slane %v89, %v92
      %95 = vbcast.lane.b32.xlu0 %v93, 256
      %v96 = vpop.permute.xlu0 %95
      %v97 = vlaneseq
      %v98 = vshrl.u32 %v97, 7
      %v99 = vsub.s32 1, %v98
      %v100 = vrot.slane %v89, %v99
      %102 = vbcast.lane.b32.xlu0 %v100, 256
      %v103 = vpop.permute.xlu0 %102
      %v104 = vld [vmem:[#allocation6] sm:$0xf]
      %v105 = vmul.f32 %v96, %v104
      %v106 = vmul.f32 %v103, %v104
      %vm107 = vcmask 60416
      %v108 = vsel %vm107, %v105, 0.0
      %v109 = vrot.slane %v108, 4
      %v110 = vadd.f32 %v108, %v109
      %v111 = vrot.slane %v110, 2
      %v112 = vadd.f32 %v110, %v111
      %v113 = vrot.slane %v112, 1
      %v114 = vadd.f32 %v112, %v113
      %v115 = vsel %vm107, %v106, 0.0
      %v116 = vrot.slane %v115, 4
      %v117 = vadd.f32 %v115, %v116
      %v118 = vrot.slane %v117, 2
      %v119 = vadd.f32 %v117, %v118
      %v120 = vrot.slane %v119, 1
      %v121 = vadd.f32 %v119, %v120
      %v122 = vld [vmem:[%s2] sm:$0x1]
      %v124 = vlaneseq
      %v125 = vshrl.u32 %v124, 7
      %v126 = vsub.s32 0, %v125
      %v127 = vrot.slane %v122, %v126
      %v129 = vadd.f32 %v114, %v127
      %v130 = vadd.f32 %v121, %v127
      %v133 = vrot.slane %v130, 7
      %v134 = vsel %vm79, %v133, %v129
      %vm136 = vcmask 58368
      %137 = vst.msk [vmem:[#allocation8] sm:$0x3] %vm136, %v134
    $region29: #{tpu_custom_call.1} parent=1 // pred_fallthru
      _
    // Predicated region
    $region30: #{tpu_custom_call.1} parent=1 // pred_check
      _
    $region31: #{tpu_custom_call.1} parent=1 // pred_check_branch
      %139 = sbr.rel (0) target = $region33
    $region32: #{tpu_custom_call.1} parent=1 // pred_region
      %s141 = ssub.s32 32, 32
      %142 = vsyncadd [#allocation5], %s141
      %s144 = sshll.u32 [#allocation8], 4
      %s145 = int_to_ptr.vmem [resolvable:$true] %s144
      %147 = dma.vmem_to_hbm [thread:$0]  %s145, 32, %s3, [#allocation5]
    $region33: #{tpu_custom_call.1} parent=1 // pred_fallthru
      _
    // Predicated region
    $region34: #{tpu_custom_call.1} parent=1 // pred_check
      _
    $region35: #{tpu_custom_call.1} parent=1 // pred_check_branch
      %149 = sbr.rel (0) target = $region37
    $region36: #{tpu_custom_call.1} parent=1 // pred_region
      %150 = dma.done [#allocation5], 32
    $region37: #{tpu_custom_call.1} parent=1 // pred_fallthru
      _
    %151 = vsyncpa [#allocation4], 1
    %152 = vsyncpa [#allocation7], 1
    %153 = vsyncpa [#allocation5], 1

</llo_original>
